<compile_context>
chip_gen: v6e
topology: v6e:2x2x1
jax: 0.10.0
libtpu: 0.0.40
codegen_flags: <defaults>
</compile_context>

<pallas_src>
import jax
import jax.numpy as jnp
from jax.experimental import pallas as pl
from jax.experimental.pallas import tpu as pltpu


_HIDDEN1 = 128
_HIDDEN2 = 64

# "NT" matmul: contract the last dim of both operands (A @ B^T).
_NT_DIMS = (((1,), (1,)), ((), ()))

_MAX_TILE_B = 4096
_SINGLE_TILE_B = 512


def _round_up(n, m):
    return ((n + m - 1) // m) * m


def _mlp_kernel(x_ref, w1_ref, b1_ref, w2_ref, b2_ref, w3t_ref, b3t_ref, ot_ref):
    # x streamed as f32; cast to bf16 on the VPU right before the MXU (free in
    # this HBM-bound regime, keeps f32 accumulation via preferred_element_type).
    x = x_ref[...].astype(jnp.bfloat16)                          # [tile_b, in]

    # fc1 + ReLU (f32 accumulate, f32 bias add).
    h1 = jnp.dot(x, w1_ref[...], preferred_element_type=jnp.float32) + b1_ref[...]
    h1 = jnp.maximum(h1, 0.0).astype(jnp.bfloat16)               # [tile_b, 128]
    # dropout(0.5): identity in eval mode.

    # fc2 + ReLU.
    h2 = jnp.dot(h1, w2_ref[...], preferred_element_type=jnp.float32) + b2_ref[...]
    h2 = jnp.maximum(h2, 0.0).astype(jnp.bfloat16)               # [tile_b, 64]
    # dropout(0.5): identity in eval mode.

    # fc3, computed transposed:  out^T[o, b] = sum_k w3^T[o, k] * h2[b, k]
    # -> the stored tile's lane dim is the batch (lane-dense, unmasked vst).
    out_t = jax.lax.dot_general(w3t_ref[...], h2, _NT_DIMS,
                                preferred_element_type=jnp.float32)
    ot_ref[...] = out_t + b3t_ref[...]                           # [out_pad8, tile_b]


def _pick_tiling(batch):
    """Returns (tile_b, n_tiles).

    Small batches: one 8-row-aligned tile (latency path).  Large batches:
    tiles up to 4096 rows with an EVEN tile count (so the 'parallel' axis
    shards across v7x's two TensorCores); tile_b is a multiple of 128 so the
    transposed output block is lane-dense.
    """
    if batch <= _SINGLE_TILE_B:
        return _round_up(batch, 8), 1
    n = max(2, pl.cdiv(batch, _MAX_TILE_B))
    if n % 2:
        n += 1
    return _round_up(pl.cdiv(batch, n), 128), n


def prepare_params(params):
    """One-time conversion of f32 [in,out]/[1,out] params into kernel layout:
    bf16 matmul weights, f32 biases, fc3 stored transposed + row-padded to a
    multiple of 8.  Call at init/checkpoint-load time, not per forward."""
    out_size = params["w3"].shape[1]
    out_pad = _round_up(out_size, 8)

    w3t = jnp.zeros((out_pad, _HIDDEN2), jnp.float32).at[:out_size].set(params["w3"].T)
    b3t = jnp.zeros((out_pad, 1), jnp.float32).at[:out_size, 0].set(
        params["b3"].reshape(-1))

    kparams = {
        "w1": params["w1"].astype(jnp.bfloat16),
        "b1": params["b1"].reshape(1, -1).astype(jnp.float32),
        "w2": params["w2"].astype(jnp.bfloat16),
        "b2": params["b2"].reshape(1, -1).astype(jnp.float32),
        "w3t": w3t.astype(jnp.bfloat16),
        "b3t": b3t,
    }
    return kparams, out_size


def chatbot_forward(x, kparams, *, out_size):
    """x: [B, input_size] f32.  kparams: prepare_params(...)[0]."""
    w1, b1 = kparams["w1"], kparams["b1"]
    w2, b2 = kparams["w2"], kparams["b2"]
    w3t, b3t = kparams["w3t"], kparams["b3t"]

    batch, input_size = x.shape
    out_pad = w3t.shape[0]

    tile_b, n_tiles = _pick_tiling(batch)
    padded_b = tile_b * n_tiles
    if padded_b != batch:
        # Row-only zero pad (no dtype cast, skipped entirely when B already
        # matches the tile multiple).
        x = jnp.pad(x, ((0, padded_b - batch), (0, 0)))

    resident = lambda a: pl.BlockSpec(a.shape, lambda i: (0, 0))

    out_t = pl.pallas_call(
        _mlp_kernel,
        out_shape=jax.ShapeDtypeStruct((out_pad, padded_b), jnp.float32),
        grid=(n_tiles,),
        in_specs=[
            pl.BlockSpec((tile_b, input_size), lambda i: (i, 0)),  # x: streamed
            resident(w1), resident(b1),                            # weights resident
            resident(w2), resident(b2),
            resident(w3t), resident(b3t),
        ],
        out_specs=pl.BlockSpec((out_pad, tile_b), lambda i: (0, i)),
        compiler_params=pltpu.CompilerParams(
            dimension_semantics=("parallel",),
            vmem_limit_bytes=32 << 20,
        ),
    )(x, w1, b1, w2, b2, w3t, b3t)

    # [out_pad, padded_b] -> [B, out_size]
    return out_t[:out_size, :batch].T


def init_params(key, input_size, output_size):
    """Deterministic param init (shapes match the module's nn.Linear layers,
    stored transposed as [in, out] so the math is x @ W + b)."""
    k1, k2, k3, k4, k5, k6 = jax.random.split(key, 6)

    def lin(kw, kb, fan_in, fan_out):
        bound = 1.0 / jnp.sqrt(fan_in)
        w = jax.random.uniform(kw, (fan_in, fan_out), jnp.float32, -bound, bound)
        b = jax.random.uniform(kb, (1, fan_out), jnp.float32, -bound, bound)
        return w, b

    w1, b1 = lin(k1, k2, input_size, _HIDDEN1)
    w2, b2 = lin(k3, k4, _HIDDEN1, _HIDDEN2)
    w3, b3 = lin(k5, k6, _HIDDEN2, output_size)
    return {"w1": w1, "b1": b1, "w2": w2, "b2": b2, "w3": w3, "b3": b3}


def reference_forward(x, p):
    h1 = jnp.maximum(x @ p["w1"] + p["b1"], 0.0)
    h2 = jnp.maximum(h1 @ p["w2"] + p["b2"], 0.0)
    return h2 @ p["w3"] + p["b3"]


if __name__ == "__main__":
    key = jax.random.PRNGKey(0)
    kx, kp = jax.random.split(key)

    batch, input_size, output_size = 8, 32, 16
    x = jax.random.normal(kx, (batch, input_size), jnp.float32)
    params = init_params(kp, input_size, output_size)

    # One-time weight prep (off the serving hot path).
    kparams, out_size = prepare_params(params)
    fwd = jax.jit(chatbot_forward, static_argnames=("out_size",))

    out = jax.block_until_ready(fwd(x, kparams, out_size=out_size))

    ref = reference_forward(x, params)
    assert out.shape == (batch, output_size)
    # bf16 MXU inputs (f32 accumulation) -> widened tolerance vs f32 reference.
    assert jnp.allclose(out, ref, atol=5e-2, rtol=5e-2), (
        float(jnp.max(jnp.abs(out - ref))))

    print("KERNEL_OK")
</pallas_src>

<mosaic_0001>
module attributes {stable_mosaic.version = 11 : i64} {
  func.func @_mlp_kernel(%arg0: i32, %arg1: memref<8x32xf32, #tpu.memory_space<vmem>>, %arg2: memref<32x128xbf16, #tpu.memory_space<vmem>>, %arg3: memref<1x128xf32, #tpu.memory_space<vmem>>, %arg4: memref<128x64xbf16, #tpu.memory_space<vmem>>, %arg5: memref<1x64xf32, #tpu.memory_space<vmem>>, %arg6: memref<16x64xbf16, #tpu.memory_space<vmem>>, %arg7: memref<16x1xf32, #tpu.memory_space<vmem>>, %arg8: memref<16x8xf32, #tpu.memory_space<vmem>>) attributes {dimension_semantics = [#tpu.dimension_semantics<parallel>], iteration_bounds = array<i64: 1>, scalar_prefetch = 0 : i64, scratch_operands = 0 : i64, tpu.core_type = #tpu.core_type<tc>, window_params = [{transform_indices = @transform_0, window_bounds = array<i64: 8, 32>}, {pipeline_mode = #tpu.pipeline_mode<synchronous>, transform_indices = @transform_1, window_bounds = array<i64: 32, 128>}, {pipeline_mode = #tpu.pipeline_mode<synchronous>, transform_indices = @transform_2, window_bounds = array<i64: 1, 128>}, {pipeline_mode = #tpu.pipeline_mode<synchronous>, transform_indices = @transform_3, window_bounds = array<i64: 128, 64>}, {pipeline_mode = #tpu.pipeline_mode<synchronous>, transform_indices = @transform_4, window_bounds = array<i64: 1, 64>}, {pipeline_mode = #tpu.pipeline_mode<synchronous>, transform_indices = @transform_5, window_bounds = array<i64: 16, 64>}, {pipeline_mode = #tpu.pipeline_mode<synchronous>, transform_indices = @transform_6, window_bounds = array<i64: 16, 1>}, {transform_indices = @transform_7, window_bounds = array<i64: 16, 8>}]} {
    %c0 = arith.constant 0 : index
    %c0_0 = arith.constant 0 : index
    %0 = vector.load %arg1[%c0, %c0_0] : memref<8x32xf32, #tpu.memory_space<vmem>>, vector<8x32xf32>
    %1 = arith.truncf %0 : vector<8x32xf32> to vector<8x32xbf16>
    %c0_1 = arith.constant 0 : index
    %c0_2 = arith.constant 0 : index
    %2 = vector.load %arg2[%c0_1, %c0_2] : memref<32x128xbf16, #tpu.memory_space<vmem>>, vector<32x128xbf16>
    %cst = arith.constant dense<0.000000e+00> : vector<8x128xf32>
    %3 = tpu.matmul %1, %2, %cst {dimension_numbers = #tpu.dot_dimension_numbers<[1], [0], [0], [1], [0, 0, 1, 1], [], []>} : vector<8x32xbf16>, vector<32x128xbf16>, vector<8x128xf32> -> vector<8x128xf32>
    %c0_3 = arith.constant 0 : index
    %c0_4 = arith.constant 0 : index
    %4 = vector.load %arg3[%c0_3, %c0_4] : memref<1x128xf32, #tpu.memory_space<vmem>>, vector<1x128xf32>
    %5 = vector.broadcast %4 : vector<1x128xf32> to vector<8x128xf32>
    %6 = arith.addf %3, %5 : vector<8x128xf32>
    %cst_5 = arith.constant 0.000000e+00 : f32
    %7 = vector.broadcast %cst_5 : f32 to vector<8x128xf32>
    %8 = arith.maximumf %6, %7 : vector<8x128xf32>
    %9 = arith.truncf %8 : vector<8x128xf32> to vector<8x128xbf16>
    %c0_6 = arith.constant 0 : index
    %c0_7 = arith.constant 0 : index
    %10 = vector.load %arg4[%c0_6, %c0_7] : memref<128x64xbf16, #tpu.memory_space<vmem>>, vector<128x64xbf16>
    %cst_8 = arith.constant dense<0.000000e+00> : vector<8x64xf32>
    %11 = tpu.matmul %9, %10, %cst_8 {dimension_numbers = #tpu.dot_dimension_numbers<[1], [0], [0], [1], [0, 0, 1, 1], [], []>} : vector<8x128xbf16>, vector<128x64xbf16>, vector<8x64xf32> -> vector<8x64xf32>
    %c0_9 = arith.constant 0 : index
    %c0_10 = arith.constant 0 : index
    %12 = vector.load %arg5[%c0_9, %c0_10] : memref<1x64xf32, #tpu.memory_space<vmem>>, vector<1x64xf32>
    %13 = vector.broadcast %12 : vector<1x64xf32> to vector<8x64xf32>
    %14 = arith.addf %11, %13 : vector<8x64xf32>
    %cst_11 = arith.constant 0.000000e+00 : f32
    %15 = vector.broadcast %cst_11 : f32 to vector<8x64xf32>
    %16 = arith.maximumf %14, %15 : vector<8x64xf32>
    %17 = arith.truncf %16 : vector<8x64xf32> to vector<8x64xbf16>
    %c0_12 = arith.constant 0 : index
    %c0_13 = arith.constant 0 : index
    %18 = vector.load %arg6[%c0_12, %c0_13] : memref<16x64xbf16, #tpu.memory_space<vmem>>, vector<16x64xbf16>
    %cst_14 = arith.constant dense<0.000000e+00> : vector<16x8xf32>
    %19 = tpu.matmul %18, %17, %cst_14 {dimension_numbers = #tpu.dot_dimension_numbers<[1], [1], [0], [0], [0, 0, 1, 0], [], []>} : vector<16x64xbf16>, vector<8x64xbf16>, vector<16x8xf32> -> vector<16x8xf32>
    %c0_15 = arith.constant 0 : index
    %c0_16 = arith.constant 0 : index
    %20 = vector.load %arg7[%c0_15, %c0_16] : memref<16x1xf32, #tpu.memory_space<vmem>>, vector<16x1xf32>
    %21 = vector.broadcast %20 : vector<16x1xf32> to vector<16x8xf32>
    %22 = arith.addf %19, %21 : vector<16x8xf32>
    %c0_17 = arith.constant 0 : index
    %c0_18 = arith.constant 0 : index
    %23 = vector.load %arg8[%c0_17, %c0_18] : memref<16x8xf32, #tpu.memory_space<vmem>>, vector<16x8xf32>
    tpu.vector_store %arg8[%c0_17, %c0_18], %22 {strides = array<i32>} : memref<16x8xf32, #tpu.memory_space<vmem>>, vector<16x8xf32>,
    return
  }
  func.func @transform_0(%arg0: i32) -> (i32, i32) {
    %c0_i32 = arith.constant 0 : i32
    %c0_i32_0 = arith.constant 0 : i32
    return %arg0, %c0_i32 : i32, i32
  }
  func.func @transform_1(%arg0: i32) -> (i32, i32) {
    %c0_i32 = arith.constant 0 : i32
    %c0_i32_0 = arith.constant 0 : i32
    %c0_i32_1 = arith.constant 0 : i32
    return %c0_i32, %c0_i32_0 : i32, i32
  }
  func.func @transform_2(%arg0: i32) -> (i32, i32) {
    %c0_i32 = arith.constant 0 : i32
    %c0_i32_0 = arith.constant 0 : i32
    %c0_i32_1 = arith.constant 0 : i32
    return %c0_i32, %c0_i32_0 : i32, i32
  }
  func.func @transform_3(%arg0: i32) -> (i32, i32) {
    %c0_i32 = arith.constant 0 : i32
    %c0_i32_0 = arith.constant 0 : i32
    %c0_i32_1 = arith.constant 0 : i32
    return %c0_i32, %c0_i32_0 : i32, i32
  }
  func.func @transform_4(%arg0: i32) -> (i32, i32) {
    %c0_i32 = arith.constant 0 : i32
    %c0_i32_0 = arith.constant 0 : i32
    %c0_i32_1 = arith.constant 0 : i32
    return %c0_i32, %c0_i32_0 : i32, i32
  }
  func.func @transform_5(%arg0: i32) -> (i32, i32) {
    %c0_i32 = arith.constant 0 : i32
    %c0_i32_0 = arith.constant 0 : i32
    %c0_i32_1 = arith.constant 0 : i32
    return %c0_i32, %c0_i32_0 : i32, i32
  }
  func.func @transform_6(%arg0: i32) -> (i32, i32) {
    %c0_i32 = arith.constant 0 : i32
    %c0_i32_0 = arith.constant 0 : i32
    %c0_i32_1 = arith.constant 0 : i32
    return %c0_i32, %c0_i32_0 : i32, i32
  }
  func.func @transform_7(%arg0: i32) -> (i32, i32) {
    %c0_i32 = arith.constant 0 : i32
    %c0_i32_0 = arith.constant 0 : i32
    return %c0_i32, %arg0 : i32, i32
  }
}

</mosaic_0001>

<llo_original>
// kernel: chatbot_forward.1
$region0: #{chatbot_forward.1}
  #allocation0 [shape = 'u32[]', space=smem, size = 0x4, offset = 0x4, fixed_abs, tag = 'smem constant byte address 0x4 - core index']
  #allocation1 [shape = 'u32[144,128]{1,0:T(1,128)}', space=vmem, size = 0x12000, scoped, tag = 'internal scratch']
  %s0 = inlined_call_operand.vmem [shape: f32[8,32], index: 0, kind: input, shape index: {}]
  %s1 = inlined_call_operand.vmem [shape: bf16[32,128], index: 1, kind: input, shape index: {}]
  %s2 = inlined_call_operand.vmem [shape: f32[1,128], index: 2, kind: input, shape index: {}]
  %s3 = inlined_call_operand.vmem [shape: bf16[128,64], index: 3, kind: input, shape index: {}]
  %s4 = inlined_call_operand.vmem [shape: f32[1,64], index: 4, kind: input, shape index: {}]
  %s5 = inlined_call_operand.vmem [shape: bf16[16,64], index: 5, kind: input, shape index: {}]
  %s6 = inlined_call_operand.vmem [shape: f32[16,1], index: 6, kind: input, shape index: {}]
  %s7 = inlined_call_operand.vmem [shape: f32[16,8], index: 7, kind: output, shape index: {}]
  %s8 = sld [smem:[#allocation0]]
  $region38: #{chatbot_forward.1} parent=0
    _
  %s10 = ssub.s32 1, %s8
  %s11 = scalar_select 0, %s10, %s8
  // Predicated region
  $region2: #{chatbot_forward.1} parent=0 // pred_check
    _
  $region3: #{chatbot_forward.1} parent=0 // pred_check_branch
    %13 = sbr.rel (0) target = $region5
  $region4: #{chatbot_forward.1} parent=0 // pred_region
    _
  $region5: #{chatbot_forward.1} parent=0 // pred_fallthru
    _
  // Predicated region
  $region6: #{chatbot_forward.1} parent=0 // pred_check
    _
  $region7: #{chatbot_forward.1} parent=0 // pred_check_branch
    %15 = sbr.rel (0) target = $region9
  $region8: #{chatbot_forward.1} parent=0 // pred_region
    _
  $region9: #{chatbot_forward.1} parent=0 // pred_fallthru
    _
  // Predicated region
  $region10: #{chatbot_forward.1} parent=0 // pred_check
    _
  $region11: #{chatbot_forward.1} parent=0 // pred_check_branch
    %17 = sbr.rel (0) target = $region13
  $region12: #{chatbot_forward.1} parent=0 // pred_region
    _
  $region13: #{chatbot_forward.1} parent=0 // pred_fallthru
    _
  // Predicated region
  $region14: #{chatbot_forward.1} parent=0 // pred_check
    _
  $region15: #{chatbot_forward.1} parent=0 // pred_check_branch
    %19 = sbr.rel (0) target = $region17
  $region16: #{chatbot_forward.1} parent=0 // pred_region
    _
  $region17: #{chatbot_forward.1} parent=0 // pred_fallthru
    _
  // Predicated region
  $region18: #{chatbot_forward.1} parent=0 // pred_check
    _
  $region19: #{chatbot_forward.1} parent=0 // pred_check_branch
    %21 = sbr.rel (0) target = $region21
  $region20: #{chatbot_forward.1} parent=0 // pred_region
    _
  $region21: #{chatbot_forward.1} parent=0 // pred_fallthru
    _
  // Predicated region
  $region22: #{chatbot_forward.1} parent=0 // pred_check
    _
  $region23: #{chatbot_forward.1} parent=0 // pred_check_branch
    %23 = sbr.rel (0) target = $region25
  $region24: #{chatbot_forward.1} parent=0 // pred_region
    _
  $region25: #{chatbot_forward.1} parent=0 // pred_fallthru
    _
  // Predicated region
  $region26: #{chatbot_forward.1} parent=0 // pred_check
    _
  $region27: #{chatbot_forward.1} parent=0 // pred_check_branch
    %25 = sbr.rel (0) target = $region29
  $region28: #{chatbot_forward.1} parent=0 // pred_region
    _
  $region29: #{chatbot_forward.1} parent=0 // pred_fallthru
    _
  %v27 = vld [vmem:[%s0] sm:$0xff]
  %v28 = vpack.c.bf16 %v27, %v27
  %v29 = vld [vmem:[%s1] sm:$0xf]
  %v30 = vld [vmem:[%s1 + $0x4] sm:$0xf]
  %v31 = vld [vmem:[%s1 + $0x8] sm:$0xf]
  %v32 = vld [vmem:[%s1 + $0xc] sm:$0xf]
  %v33 = vld [vmem:[%s2] sm:$0x1]
  %v35 = vlaneseq
  %v36 = vshrl.u32 %v35, 7
  %v37 = vsub.s32 0, %v36
  %v38 = vrot.slane %v33, %v37
  %v44 = vunpack.c.l.b16 %v29
  %v45 = vunpack.c.l.b16 %v30
  %v46 = vunpack.c.l.b16 %v31
  %v47 = vunpack.c.l.b16 %v32
  %v48 = vpack.c.b16 %v45, %v44
  %v49 = vpack.c.b16 %v47, %v46
  %vm52 = vcmask 261120
  %v54 = vsel %vm52, %v28, 0
  %56 = vmatprep.subr.bf16.mxu0 0
  %57 = vmatpush1.bf16.msra.mxu0 0
  %58 = vmatprep.subr.bf16.mxu0 0
  %59 = vmatpush1.bf16.msra.mxu0 0
  %60 = vmatprep.subr.bf16.mxu0 0
  %61 = vmatpush1.bf16.msra.mxu0 0
  %62 = vmatprep.subr.bf16.mxu0 0
  %63 = vmatpush1.bf16.msra.mxu0 0
  %64 = vmatprep.subr.bf16.mxu0 0
  %65 = vmatpush1.bf16.msra.mxu0 0
  %66 = vmatprep.subr.bf16.mxu0 0
  %67 = vmatpush1.bf16.msra.mxu0 0
  %68 = vmatprep.subr.bf16.mxu0 0
  %69 = vmatpush1.bf16.msra.mxu0 %v49
  %70 = vmatprep.subr.bf16.mxu0 0
  %71 = vmatpush1.bf16.msra.mxu0 %v48
  %72 = vmatprep.subr.bf16.mxu0 0
  %73 = vmatpush2.bf16.msra.mxu0 0
  %74 = vmatprep.subr.bf16.mxu0 0
  %75 = vmatpush2.bf16.msra.mxu0 0
  %76 = vmatprep.subr.bf16.mxu0 0
  %77 = vmatpush2.bf16.msra.mxu0 0
  %78 = vmatprep.subr.bf16.mxu0 0
  %79 = vmatpush2.bf16.msra.mxu0 0
  %80 = vmatprep.subr.bf16.mxu0 0
  %81 = vmatpush2.bf16.msra.mxu0 0
  %82 = vmatprep.subr.bf16.mxu0 0
  %83 = vmatpush2.bf16.msra.mxu0 0
  %84 = vmatprep.subr.bf16.mxu0 0
  %85 = vmatpush2.bf16.msra.mxu0 0
  %86 = vmatprep.subr.bf16.mxu0 0
  %87 = vmatpush2.bf16.msra.mxu0 0
  %88 = vmatprep.mubr.bf16.mxu0 0
  %89 = vmatmul.mubr.bf16.gmra.mxu0 %v54
  %v90 = vpop.f32.mrf.mxu0
  %v91 = vadd.f32 %v38, %v90
  %v92 = vpop.f32.mrf.mxu0
  %v93 = vpop.f32.mrf.mxu0
  %v94 = vpop.f32.mrf.mxu0
  %95 = vdwg.mxu0
  %v96 = vmax.f32 %v91, 0.0
  %v97 = vpack.c.bf16 %v96, %v96
  %v98 = vld [vmem:[%s3] sm:$0xf]
  %v99 = vld [vmem:[%s3 + $0x4] sm:$0xf]
  %v100 = vld [vmem:[%s3 + $0x8] sm:$0xf]
  %v101 = vld [vmem:[%s3 + $0xc] sm:$0xf]
  %v102 = vld [vmem:[%s3 + $0x10] sm:$0xf]
  %v103 = vld [vmem:[%s3 + $0x14] sm:$0xf]
  %v104 = vld [vmem:[%s3 + $0x18] sm:$0xf]
  %v105 = vld [vmem:[%s3 + $0x1c] sm:$0xf]
  %v106 = vld [vmem:[%s3 + $0x20] sm:$0xf]
  %v107 = vld [vmem:[%s3 + $0x24] sm:$0xf]
  %v108 = vld [vmem:[%s3 + $0x28] sm:$0xf]
  %v109 = vld [vmem:[%s3 + $0x2c] sm:$0xf]
  %v110 = vld [vmem:[%s3 + $0x30] sm:$0xf]
  %v111 = vld [vmem:[%s3 + $0x34] sm:$0xf]
  %v112 = vld [vmem:[%s3 + $0x38] sm:$0xf]
  %v113 = vld [vmem:[%s3 + $0x3c] sm:$0xf]
  %v114 = vld [vmem:[%s4] sm:$0x1]
  %v116 = vlaneseq
  %v117 = vshrl.u32 %v116, 7
  %v118 = vsub.s32 0, %v117
  %v119 = vrot.slane %v114, %v118
  %v137 = vunpack.c.l.b16 %v98
  %v138 = vunpack.c.l.b16 %v99
  %v139 = vunpack.c.l.b16 %v100
  %v140 = vunpack.c.l.b16 %v101
  %v141 = vunpack.c.l.b16 %v102
  %v142 = vunpack.c.l.b16 %v103
  %v143 = vunpack.c.l.b16 %v104
  %v144 = vunpack.c.l.b16 %v105
  %v145 = vunpack.c.l.b16 %v106
  %v146 = vunpack.c.l.b16 %v107
  %v147 = vunpack.c.l.b16 %v108
  %v148 = vunpack.c.l.b16 %v109
  %v149 = vunpack.c.l.b16 %v110
  %v150 = vunpack.c.l.b16 %v111
  %v151 = vunpack.c.l.b16 %v112
  %v152 = vunpack.c.l.b16 %v113
  %v153 = vpack.c.b16 %v138, %v137
  %v154 = vpack.c.b16 %v140, %v139
  %v155 = vpack.c.b16 %v142, %v141
  %v156 = vpack.c.b16 %v144, %v143
  %v157 = vpack.c.b16 %v146, %v145
  %v158 = vpack.c.b16 %v148, %v147
  %v159 = vpack.c.b16 %v150, %v149
  %v160 = vpack.c.b16 %v152, %v151
  %169 = vmatprep.subr.bf16.mxu0 0
  %170 = vmatpush1.bf16.msra.mxu0 %v160
  %171 = vmatprep.subr.bf16.mxu0 0
  %172 = vmatpush1.bf16.msra.mxu0 %v159
  %173 = vmatprep.subr.bf16.mxu0 0
  %174 = vmatpush1.bf16.msra.mxu0 %v158
  %175 = vmatprep.subr.bf16.mxu0 0
  %176 = vmatpush1.bf16.msra.mxu0 %v157
  %177 = vmatprep.subr.bf16.mxu0 0
  %178 = vmatpush1.bf16.msra.mxu0 %v156
  %179 = vmatprep.subr.bf16.mxu0 0
  %180 = vmatpush1.bf16.msra.mxu0 %v155
  %181 = vmatprep.subr.bf16.mxu0 0
  %182 = vmatpush1.bf16.msra.mxu0 %v154
  %183 = vmatprep.subr.bf16.mxu0 0
  %184 = vmatpush1.bf16.msra.mxu0 %v153
  %185 = vmatprep.subr.bf16.mxu0 0
  %186 = vmatpush2.bf16.msra.mxu0 0
  %187 = vmatprep.subr.bf16.mxu0 0
  %188 = vmatpush2.bf16.msra.mxu0 0
  %189 = vmatprep.subr.bf16.mxu0 0
  %190 = vmatpush2.bf16.msra.mxu0 0
  %191 = vmatprep.subr.bf16.mxu0 0
  %192 = vmatpush2.bf16.msra.mxu0 0
  %193 = vmatprep.subr.bf16.mxu0 0
  %194 = vmatpush2.bf16.msra.mxu0 0
  %195 = vmatprep.subr.bf16.mxu0 0
  %196 = vmatpush2.bf16.msra.mxu0 0
  %197 = vmatprep.subr.bf16.mxu0 0
  %198 = vmatpush2.bf16.msra.mxu0 0
  %199 = vmatprep.subr.bf16.mxu0 0
  %200 = vmatpush2.bf16.msra.mxu0 0
  %201 = vmatprep.mubr.bf16.mxu0 0
  %202 = vmatmul.mubr.bf16.gmra.mxu0 %v97
  %v203 = vpop.f32.mrf.mxu0
  %v204 = vadd.f32 %v119, %v203
  %v205 = vpop.f32.mrf.mxu0
  %v206 = vpop.f32.mrf.mxu0
  %v207 = vpop.f32.mrf.mxu0
  %208 = vdwg.mxu0
  %v209 = vmax.f32 %v204, 0.0
  %v210 = vpack.c.bf16 %v209, %v209
  %v211 = vld [vmem:[%s5] sm:$0xf]
  %v212 = vld [vmem:[%s5 + $0x4] sm:$0xf]
  %v213 = vld [vmem:[%s6] sm:$0xff]
  %v214 = vld [vmem:[%s6 + $0x8] sm:$0xff]
  %216 = vset.pattern.permute.xlu0 0
  %217 = vperm.xlu0 %216, %v213
  %v218 = vpop.permute.xlu0 %217
  %221 = vset.pattern.permute.xlu0 0
  %222 = vperm.xlu0 %221, %v214
  %v223 = vpop.permute.xlu0 %222
  %v227 = vunpack.c.l.b16 %v211
  %v228 = vunpack.c.l.b16 %v212
  %v229 = vpack.c.b16 %v228, %v227
  %vm230 = vcmask 523264
  %v232 = vsel %vm230, %v229, 0
  %v235 = vsel %vm230, %v210, 0
  %237 = vmatprep.subr.bf16.mxu0 0
  %238 = vmatpush1.bf16.xpose.msra.mxu0 0
  %239 = vmatprep.subr.bf16.mxu0 0
  %240 = vmatpush1.bf16.xpose.msra.mxu0 0
  %241 = vmatprep.subr.bf16.mxu0 0
  %242 = vmatpush1.bf16.xpose.msra.mxu0 0
  %243 = vmatprep.subr.bf16.mxu0 0
  %244 = vmatpush1.bf16.xpose.msra.mxu0 0
  %245 = vmatprep.subr.bf16.mxu0 0
  %246 = vmatpush1.bf16.xpose.msra.mxu0 0
  %247 = vmatprep.subr.bf16.mxu0 0
  %248 = vmatpush1.bf16.xpose.msra.mxu0 0
  %249 = vmatprep.subr.bf16.mxu0 0
  %250 = vmatpush1.bf16.xpose.msra.mxu0 0
  %251 = vmatprep.subr.bf16.mxu0 0
  %252 = vmatpush1.bf16.xpose.msra.mxu0 %v235
  %253 = vmatprep.subr.bf16.mxu0 0
  %254 = vmatpush2.bf16.xpose.msra.mxu0 0
  %255 = vmatprep.subr.bf16.mxu0 0
  %256 = vmatpush2.bf16.xpose.msra.mxu0 0
  %257 = vmatprep.subr.bf16.mxu0 0
  %258 = vmatpush2.bf16.xpose.msra.mxu0 0
  %259 = vmatprep.subr.bf16.mxu0 0
  %260 = vmatpush2.bf16.xpose.msra.mxu0 0
  %261 = vmatprep.subr.bf16.mxu0 0
  %262 = vmatpush2.bf16.xpose.msra.mxu0 0
  %263 = vmatprep.subr.bf16.mxu0 0
  %264 = vmatpush2.bf16.xpose.msra.mxu0 0
  %265 = vmatprep.subr.bf16.mxu0 0
  %266 = vmatpush2.bf16.xpose.msra.mxu0 0
  %267 = vmatprep.subr.bf16.mxu0 0
  %268 = vmatpush2.bf16.xpose.msra.mxu0 0
  %269 = vmatprep.mubr.bf16.mxu0 0
  %270 = vmatmul.mubr.bf16.gmra.mxu0 %v232
  %v271 = vpop.f32.mrf.mxu0
  %v272 = vadd.f32 %v218, %v271
  %v273 = vpop.f32.mrf.mxu0
  %v274 = vpop.f32.mrf.mxu0
  %v275 = vadd.f32 %v223, %v274
  %v276 = vpop.f32.mrf.mxu0
  %277 = vdwg.mxu0
  %vm278 = vcmask 64512
  %279 = vst.msk [vmem:[%s7] sm:$0xff] %vm278, %v272
  %280 = vst.msk [vmem:[%s7 + $0x8] sm:$0xff] %vm278, %v275
  // Predicated region
  $region30: #{chatbot_forward.1} parent=0 // pred_check
    _
  $region31: #{chatbot_forward.1} parent=0 // pred_check_branch
    %282 = sbr.rel (0) target = $region33
  $region32: #{chatbot_forward.1} parent=0 // pred_region
    _
  $region33: #{chatbot_forward.1} parent=0 // pred_fallthru
    _
  // Predicated region
  $region34: #{chatbot_forward.1} parent=0 // pred_check
    _
  $region35: #{chatbot_forward.1} parent=0 // pred_check_branch
    %284 = sbr.rel (0) target = $region37
  $region36: #{chatbot_forward.1} parent=0 // pred_region
    _
  $region37: #{chatbot_forward.1} parent=0 // pred_fallthru
    _

</llo_original>
